<compile_context>
chip_gen: v5e
topology: v5e:2x2
jax: 0.10.0
libtpu: 0.0.40
codegen_flags: <defaults>
</compile_context>

<pallas_src>
import jax
import jax.numpy as jnp
from jax.experimental import pallas as pl
from jax.experimental.pallas import tpu as pltpu


def _linear_bias_relu_kernel(x_ref, w_ref, b_ref, o_ref):
    # x_ref: (tm, tk)  activation tile (bf16 or f32)
    # w_ref: (tk, tn)  pre-transposed weight tile (bf16 or f32)
    # b_ref: (1,  tn)  f32 bias tile
    # o_ref: (tm, tn)  f32 output tile; doubles as the K accumulator because
    #                  its index_map ignores the K grid axis (stays resident).
    k = pl.program_id(2)

    @pl.when(k == 0)
    def _():
        # Initialize the resident output tile with the broadcast bias:
        # no separate scratch, no zero-fill, no final acc->out copy.
        o_ref[...] = jnp.broadcast_to(b_ref[...], o_ref.shape)

    o_ref[...] += jnp.dot(x_ref[...], w_ref[...],
                          preferred_element_type=jnp.float32)

    @pl.when(k == pl.num_programs(2) - 1)
    def _():
        o_ref[...] = jnp.maximum(o_ref[...], 0.0)   # fused ReLU epilogue (lean)


def _round_up(x, m):
    return (x + m - 1) // m * m


def _pick_tile(dim, preferred, align, max_waste=0.125):
    """Largest tile <= preferred (multiple of `align`) whose padding waste on
    `dim` (already a multiple of `align`) is <= max_waste."""
    t = max(align, (min(preferred, dim) // align) * align)
    while t > align:
        if _round_up(dim, t) - dim <= max_waste * dim:
            return t
        t -= align
    return align


def _vmem_capacity_bytes():
    try:
        cap = getattr(pltpu.get_tpu_info(), "vmem_capacity_bytes", None)
        if cap:
            return int(cap)
    except Exception:
        pass
    return 64 << 20   # conservative fallback: v7x has 64 MiB VMEM per TensorCore


def linear_relu(x, w, b, *, compute_dtype=jnp.bfloat16, tm=None, tn=None, tk=None):
    """Forward pass of Linear(inputs, outputs, norm=None, act='relu').

    x : (B, In)   float32
    w : (Out, In) float32   (PyTorch nn.Linear weight layout)
    b : (Out,)    float32
    returns (B, Out) float32

    compute_dtype: MXU input dtype (bf16 default; f32 for exact numerics).
    """
    B, In = x.shape
    Out, In2 = w.shape
    assert In == In2, "weight inner dim must match input feature dim"
    assert b.shape == (Out,)

    in_dtype = jnp.dtype(compute_dtype) if compute_dtype is not None else x.dtype
    in_bytes = jnp.dtype(in_dtype).itemsize

    # Lane/sublane-friendly padded extents.
    Mp = _round_up(B, 8)
    Kp = _round_up(In, 128)
    Np = _round_up(Out, 128)

    # Default tile targets (review): bf16 (512,1024,512), f32 (256,1024,512).
    if tm is None:
        tm = 512 if in_bytes <= 2 else 256
    if tn is None:
        tn = 1024
    if tk is None:
        tk = 512

    # Ladder selection caps tile-multiple pad waste at ~12.5%.
    tm = _pick_tile(Mp, tm, 8)
    tn = _pick_tile(Np, tn, 128)
    tk = _pick_tile(Kp, tk, 128)

    # Per-generation VMEM budget (v7x: 64 MiB/TC, v5e/v6e: 128 MiB).  Keep the
    # double-buffered working set well inside it (defaults use ~7-10 MiB).
    vmem_cap = _vmem_capacity_bytes()
    budget = vmem_cap // 2

    def footprint(tm_, tn_, tk_):
        return (2 * tm_ * tk_ * in_bytes     # x double buffer
                + 2 * tk_ * tn_ * in_bytes   # w double buffer
                + 2 * tm_ * tn_ * 4          # out double buffer (f32)
                + 2 * tn_ * 4)               # bias

    while footprint(tm, tn, tk) > budget:
        if tn > 128:
            tn = max(128, (tn // 2 // 128) * 128)
        elif tk > 128:
            tk = max(128, (tk // 2 // 128) * 128)
        elif tm > 8:
            tm = max(8, (tm // 2 // 8) * 8)
        else:
            break

    Mp = _round_up(Mp, tm)
    Np = _round_up(Np, tn)
    Kp = _round_up(Kp, tk)

    # v7x megacore: make sure there are >= 2 parallel (M, N) blocks when the
    # problem allows an even split, so both TensorCores get work.
    if (Mp // tm) * (Np // tn) < 2:
        if tn % 256 == 0:
            tn //= 2
        elif tm % 16 == 0:
            tm //= 2

    grid = (Mp // tm, Np // tn, Kp // tk)

    # One-time wrapper-side prep (XLA fuses cast + transpose + pad per operand):
    #   * bf16 cast (default) halves HBM/VMEM traffic,
    #   * weight transposed to (In, Out) -> plain NN matmul in the kernel,
    #   * pads only when needed (K zero-pad is required for the reduction;
    #     M/N pads are sliced off afterwards).
    xc = x.astype(in_dtype) if x.dtype != in_dtype else x
    if (Mp, Kp) != (B, In):
        xc = jnp.pad(xc, ((0, Mp - B), (0, Kp - In)))

    wt = w.T.astype(in_dtype) if w.dtype != in_dtype else w.T
    if (Kp, Np) != (In, Out):
        wt = jnp.pad(wt, ((0, Kp - In), (0, Np - Out)))

    bp = b.astype(jnp.float32)
    if Np != Out:
        bp = jnp.pad(bp, (0, Np - Out))
    b2 = bp.reshape(1, Np)

    cost = pl.CostEstimate(
        flops=2 * Mp * Np * Kp,
        transcendentals=0,
        bytes_accessed=(Mp * Kp * in_bytes + Kp * Np * in_bytes
                        + Mp * Np * 4 + Np * 4),
    )

    out = pl.pallas_call(
        _linear_bias_relu_kernel,
        out_shape=jax.ShapeDtypeStruct((Mp, Np), jnp.float32),
        grid_spec=pltpu.PrefetchScalarGridSpec(
            num_scalar_prefetch=0,
            grid=grid,
            in_specs=[
                pl.BlockSpec((tm, tk), lambda i, j, k: (i, k)),   # x tile
                pl.BlockSpec((tk, tn), lambda i, j, k: (k, j)),   # w^T tile
                pl.BlockSpec((1, tn), lambda i, j, k: (0, j)),    # bias tile
            ],
            out_specs=pl.BlockSpec((tm, tn), lambda i, j, k: (i, j)),
        ),
        compiler_params=pltpu.CompilerParams(
            dimension_semantics=("parallel", "parallel", "arbitrary"),
            vmem_limit_bytes=min(int(vmem_cap * 3 // 4), 100 << 20),
        ),
        cost_estimate=cost,
    )(xc, wt, b2)

    if (Mp, Np) != (B, Out):
        out = out[:B, :Out]
    return out


if __name__ == "__main__":
    key = jax.random.PRNGKey(0)
    kx, kw, kb = jax.random.split(key, 3)

    # Small shapes consistent with the module.
    B, In, Out = 8, 32, 64
    bound = 1.0 / (In ** 0.5)
    x = jax.random.normal(kx, (B, In), dtype=jnp.float32)
    w = jax.random.uniform(kw, (Out, In), minval=-bound, maxval=bound,
                           dtype=jnp.float32)
    b = jax.random.uniform(kb, (Out,), minval=-bound, maxval=bound,
                           dtype=jnp.float32)
    ref = jnp.maximum(x @ w.T + b, 0.0)

    # Default bf16 MXU path (f32 accumulate): looser tolerance vs f32 reference
    # is expected precision drift, not a bug.
    out_bf16 = jax.block_until_ready(linear_relu(x, w, b))
    assert out_bf16.shape == (B, Out)
    assert jnp.allclose(out_bf16, ref, atol=1e-2, rtol=1e-2)

    # Exact f32 path matches the PyTorch reference tightly.
    out_f32 = jax.block_until_ready(linear_relu(x, w, b, compute_dtype=jnp.float32))
    assert jnp.allclose(out_f32, ref, atol=1e-5, rtol=1e-5)

    # Ragged / multi-tile case: exercises K accumulation across grid steps,
    # N/K padding, and the megacore grid-split path.
    B2, In2, Out2 = 16, 768, 320
    x2 = jax.random.normal(kx, (B2, In2), dtype=jnp.float32) * 0.1
    w2 = jax.random.uniform(kw, (Out2, In2), minval=-0.05, maxval=0.05,
                            dtype=jnp.float32)
    b2 = jax.random.uniform(kb, (Out2,), minval=-0.05, maxval=0.05,
                            dtype=jnp.float32)
    ref2 = jnp.maximum(x2 @ w2.T + b2, 0.0)
    out2 = jax.block_until_ready(linear_relu(x2, w2, b2, compute_dtype=jnp.float32))
    assert jnp.allclose(out2, ref2, atol=1e-4, rtol=1e-4)

    # TODO(synk): norm='bn'/'ln' and non-ReLU activations of the module are not
    # implemented here; the default config (bias + ReLU) is what is exercised.
    print("KERNEL_OK")
</pallas_src>

<mosaic_0001>
module attributes {stable_mosaic.version = 11 : i64} {
  func.func @_linear_bias_relu_kernel(%arg0: i32, %arg1: i32, %arg2: i32, %arg3: memref<8x128xbf16, #tpu.memory_space<vmem>>, %arg4: memref<128x128xbf16, #tpu.memory_space<vmem>>, %arg5: memref<1x128xf32, #tpu.memory_space<vmem>>, %arg6: memref<8x128xf32, #tpu.memory_space<vmem>>) attributes {dimension_semantics = [#tpu.dimension_semantics<parallel>, #tpu.dimension_semantics<parallel>, #tpu.dimension_semantics<arbitrary>], iteration_bounds = array<i64: 1, 1, 1>, scalar_prefetch = 0 : i64, scratch_operands = 0 : i64, tpu.core_type = #tpu.core_type<tc>, window_params = [{transform_indices = @transform_0, window_bounds = array<i64: 8, 128>}, {transform_indices = @transform_1, window_bounds = array<i64: 128, 128>}, {transform_indices = @transform_2, window_bounds = array<i64: 1, 128>}, {transform_indices = @transform_3, window_bounds = array<i64: 8, 128>}]} {
    %c0_i32 = arith.constant 0 : i32
    %0 = arith.cmpi eq, %arg2, %c0_i32 : i32
    %1 = arith.extui %0 : i1 to i32
    %c0_i32_0 = arith.constant 0 : i32
    %2 = arith.cmpi ne, %1, %c0_i32_0 : i32
    scf.if %2 {
      %c0_10 = arith.constant 0 : index
      %c0_11 = arith.constant 0 : index
      %12 = vector.load %arg5[%c0_10, %c0_11] : memref<1x128xf32, #tpu.memory_space<vmem>>, vector<1x128xf32>
      %13 = vector.shape_cast %12 : vector<1x128xf32> to vector<1x128xf32>
      %14 = vector.broadcast %13 : vector<1x128xf32> to vector<8x128xf32>
      %c0_12 = arith.constant 0 : index
      %c0_13 = arith.constant 0 : index
      %15 = vector.load %arg6[%c0_12, %c0_13] : memref<8x128xf32, #tpu.memory_space<vmem>>, vector<8x128xf32>
      tpu.vector_store %arg6[%c0_12, %c0_13], %14 {strides = array<i32>} : memref<8x128xf32, #tpu.memory_space<vmem>>, vector<8x128xf32>,
    } else {
    }
    %c0 = arith.constant 0 : index
    %c0_1 = arith.constant 0 : index
    %3 = vector.load %arg6[%c0, %c0_1] : memref<8x128xf32, #tpu.memory_space<vmem>>, vector<8x128xf32>
    %c0_2 = arith.constant 0 : index
    %c0_3 = arith.constant 0 : index
    %4 = vector.load %arg3[%c0_2, %c0_3] : memref<8x128xbf16, #tpu.memory_space<vmem>>, vector<8x128xbf16>
    %c0_4 = arith.constant 0 : index
    %c0_5 = arith.constant 0 : index
    %5 = vector.load %arg4[%c0_4, %c0_5] : memref<128x128xbf16, #tpu.memory_space<vmem>>, vector<128x128xbf16>
    %cst = arith.constant dense<0.000000e+00> : vector<8x128xf32>
    %6 = tpu.matmul %4, %5, %cst {dimension_numbers = #tpu.dot_dimension_numbers<[1], [0], [0], [1], [0, 0, 1, 1], [], []>} : vector<8x128xbf16>, vector<128x128xbf16>, vector<8x128xf32> -> vector<8x128xf32>
    %7 = arith.addf %3, %6 : vector<8x128xf32>
    %c0_6 = arith.constant 0 : index
    %c0_7 = arith.constant 0 : index
    %8 = vector.load %arg6[%c0_6, %c0_7] : memref<8x128xf32, #tpu.memory_space<vmem>>, vector<8x128xf32>
    tpu.vector_store %arg6[%c0_6, %c0_7], %7 {strides = array<i32>} : memref<8x128xf32, #tpu.memory_space<vmem>>, vector<8x128xf32>,
    %c0_i32_8 = arith.constant 0 : i32
    %9 = arith.cmpi eq, %arg2, %c0_i32_8 : i32
    %10 = arith.extui %9 : i1 to i32
    %c0_i32_9 = arith.constant 0 : i32
    %11 = arith.cmpi ne, %10, %c0_i32_9 : i32
    scf.if %11 {
      %c0_10 = arith.constant 0 : index
      %c0_11 = arith.constant 0 : index
      %12 = vector.load %arg6[%c0_10, %c0_11] : memref<8x128xf32, #tpu.memory_space<vmem>>, vector<8x128xf32>
      %cst_12 = arith.constant 0.000000e+00 : f32
      %13 = vector.broadcast %cst_12 : f32 to vector<8x128xf32>
      %14 = arith.maximumf %12, %13 : vector<8x128xf32>
      %c0_13 = arith.constant 0 : index
      %c0_14 = arith.constant 0 : index
      %15 = vector.load %arg6[%c0_13, %c0_14] : memref<8x128xf32, #tpu.memory_space<vmem>>, vector<8x128xf32>
      tpu.vector_store %arg6[%c0_13, %c0_14], %14 {strides = array<i32>} : memref<8x128xf32, #tpu.memory_space<vmem>>, vector<8x128xf32>,
    } else {
    }
    return
  }
  func.func @transform_0(%arg0: i32, %arg1: i32, %arg2: i32) -> (i32, i32) {
    %c0_i32 = arith.constant 0 : i32
    return %arg0, %arg2 : i32, i32
  }
  func.func @transform_1(%arg0: i32, %arg1: i32, %arg2: i32) -> (i32, i32) {
    %c0_i32 = arith.constant 0 : i32
    return %arg2, %arg1 : i32, i32
  }
  func.func @transform_2(%arg0: i32, %arg1: i32, %arg2: i32) -> (i32, i32) {
    %c0_i32 = arith.constant 0 : i32
    %c0_i32_0 = arith.constant 0 : i32
    return %c0_i32, %arg1 : i32, i32
  }
  func.func @transform_3(%arg0: i32, %arg1: i32, %arg2: i32) -> (i32, i32) {
    %c0_i32 = arith.constant 0 : i32
    return %arg0, %arg1 : i32, i32
  }
}

</mosaic_0001>

<llo_original>
// kernel: tpu_custom_call.1
$region0: #{tpu_custom_call.1}
  #allocation0 [shape = 'u32[]', space=smem, size = 0x4, offset = 0x4, fixed_abs, tag = 'smem constant byte address 0x4 - core index']
  #allocation1 [shape = 'u32[72,128]{1,0:T(1,128)}', space=vmem, size = 0x9000, scoped, tag = 'internal scratch']
  %s0 = inlined_call_operand.hbm [shape: bf16[8,128], index: 0, kind: input, shape index: {}]
  %s1 = inlined_call_operand.hbm [shape: bf16[128,128], index: 1, kind: input, shape index: {}]
  %s2 = inlined_call_operand.vmem [shape: f32[1,128], index: 2, kind: input, shape index: {}]
  %s3 = inlined_call_operand.hbm [shape: f32[8,128], index: 3, kind: output, shape index: {}]
  %s4 = sld [smem:[#allocation0]]
  $region38: #{tpu_custom_call.1} parent=0
    _
  %s6 = ssub.s32 1, %s4
  %s7 = scalar_select 0, %s6, %s4
  $region1: #{tpu_custom_call.1} parent=0
    #allocation2 [shape = 'u8[2048]{0}', space=vmem, size = 0x800, scoped, tag = 'input window, operand 0, single buffered']
    #allocation3 [shape = 's32[1]{0}', space=sflag, size = 0x4, scoped, tag = 'scoped memory for tpu_custom_call.1']
    #allocation4 [shape = 's32[1]{0}', space=sflag, size = 0x4, scoped, tag = 'scoped memory for tpu_custom_call.1']
    #allocation5 [shape = 'u8[32768]{0}', space=vmem, size = 0x8000, scoped, tag = 'input window, operand 1, single buffered']
    #allocation6 [shape = 's32[1]{0}', space=sflag, size = 0x4, scoped, tag = 'scoped memory for tpu_custom_call.1']
    #allocation7 [shape = 'u8[4096]{0}', space=vmem, size = 0x1000, scoped, tag = 'output window, operand 0, single buffered']
    %8 = vsyncpa [#allocation3], 0
    %9 = vsyncpa [#allocation6], 0
    %10 = vsyncpa [#allocation4], 0
    // Predicated region
    $region2: #{tpu_custom_call.1} parent=1 // pred_check
      _
    $region3: #{tpu_custom_call.1} parent=1 // pred_check_branch
      %12 = sbr.rel (0) target = $region5
    $region4: #{tpu_custom_call.1} parent=1 // pred_region
      %14 = vsyncadd [#allocation3], 0
      %s16 = sshll.u32 %s0, 4
      %s17 = int_to_ptr.hbm [resolvable:$true] %s16
      %s18 = sshll.u32 [#allocation2], 4
      %s19 = int_to_ptr.vmem [resolvable:$true] %s18
      %21 = dma.hbm_to_vmem [thread:$0]  %s17, 64, %s19, [#allocation3]
    $region5: #{tpu_custom_call.1} parent=1 // pred_fallthru
      _
    // Predicated region
    $region6: #{tpu_custom_call.1} parent=1 // pred_check
      _
    $region7: #{tpu_custom_call.1} parent=1 // pred_check_branch
      %23 = sbr.rel (0) target = $region9
    $region8: #{tpu_custom_call.1} parent=1 // pred_region
      %25 = vsyncadd [#allocation6], 0
      %s26 = sshll.u32 %s1, 4
      %s27 = int_to_ptr.hbm [resolvable:$true] %s26
      %s28 = sshll.u32 [#allocation5], 4
      %s29 = int_to_ptr.vmem [resolvable:$true] %s28
      %34 = dma.hbm_to_vmem [thread:$0]  %s27, 1024, %s29, [#allocation6], 64, 64, 4
    $region9: #{tpu_custom_call.1} parent=1 // pred_fallthru
      _
    // Predicated region
    $region10: #{tpu_custom_call.1} parent=1 // pred_check
      _
    $region11: #{tpu_custom_call.1} parent=1 // pred_check_branch
      %36 = sbr.rel (0) target = $region13
    $region12: #{tpu_custom_call.1} parent=1 // pred_region
      _
    $region13: #{tpu_custom_call.1} parent=1 // pred_fallthru
      _
    // Predicated region
    $region14: #{tpu_custom_call.1} parent=1 // pred_check
      _
    $region15: #{tpu_custom_call.1} parent=1 // pred_check_branch
      %38 = sbr.rel (0) target = $region17
    $region16: #{tpu_custom_call.1} parent=1 // pred_region
      %40 = dma.done [#allocation3], 64
    $region17: #{tpu_custom_call.1} parent=1 // pred_fallthru
      _
    // Predicated region
    $region18: #{tpu_custom_call.1} parent=1 // pred_check
      _
    $region19: #{tpu_custom_call.1} parent=1 // pred_check_branch
      %42 = sbr.rel (0) target = $region21
    $region20: #{tpu_custom_call.1} parent=1 // pred_region
      %44 = dma.done [#allocation6], 1024
    $region21: #{tpu_custom_call.1} parent=1 // pred_fallthru
      _
    %p45 = scmp.eq.s32.totalorder 0, 0
    // Predicated region
    $region22: #{tpu_custom_call.1} parent=1 // pred_check
      %p46 = pneg %p45
    $region23: #{tpu_custom_call.1} parent=1 // pred_check_branch
      %48 = sbr.rel (%p46) target = $region25
    $region24: #{tpu_custom_call.1} parent=1 // pred_region
      %v49 = vld [vmem:[%s2] sm:$0x1]
      %v51 = vperm.slane %v49, 0
      %53 = vst [vmem:[#allocation7] sm:$0xff] %v51
    $region25: #{tpu_custom_call.1} parent=1 // pred_fallthru
      _
    %v54 = vld [vmem:[#allocation7] sm:$0xff]
    %v55 = vld [vmem:[#allocation2] sm:$0xf]
    %v56 = vld [vmem:[#allocation5] sm:$0xf]
    %v57 = vld [vmem:[#allocation5 + $0x4] sm:$0xf]
    %v58 = vld [vmem:[#allocation5 + $0x8] sm:$0xf]
    %v59 = vld [vmem:[#allocation5 + $0xc] sm:$0xf]
    %v60 = vld [vmem:[#allocation5 + $0x10] sm:$0xf]
    %v61 = vld [vmem:[#allocation5 + $0x14] sm:$0xf]
    %v62 = vld [vmem:[#allocation5 + $0x18] sm:$0xf]
    %v63 = vld [vmem:[#allocation5 + $0x1c] sm:$0xf]
    %v64 = vld [vmem:[#allocation5 + $0x20] sm:$0xf]
    %v65 = vld [vmem:[#allocation5 + $0x24] sm:$0xf]
    %v66 = vld [vmem:[#allocation5 + $0x28] sm:$0xf]
    %v67 = vld [vmem:[#allocation5 + $0x2c] sm:$0xf]
    %v68 = vld [vmem:[#allocation5 + $0x30] sm:$0xf]
    %v69 = vld [vmem:[#allocation5 + $0x34] sm:$0xf]
    %v70 = vld [vmem:[#allocation5 + $0x38] sm:$0xf]
    %v71 = vld [vmem:[#allocation5 + $0x3c] sm:$0xf]
    %v88 = vunpack.c.l.b16 %v56
    %v89 = vunpack.c.l.b16 %v57
    %v90 = vunpack.c.l.b16 %v58
    %v91 = vunpack.c.l.b16 %v59
    %v92 = vunpack.c.l.b16 %v60
    %v93 = vunpack.c.l.b16 %v61
    %v94 = vunpack.c.l.b16 %v62
    %v95 = vunpack.c.l.b16 %v63
    %v96 = vunpack.c.l.b16 %v64
    %v97 = vunpack.c.l.b16 %v65
    %v98 = vunpack.c.l.b16 %v66
    %v99 = vunpack.c.l.b16 %v67
    %v100 = vunpack.c.l.b16 %v68
    %v101 = vunpack.c.l.b16 %v69
    %v102 = vunpack.c.l.b16 %v70
    %v103 = vunpack.c.l.b16 %v71
    %v104 = vpack.c.b16 %v89, %v88
    %v105 = vpack.c.b16 %v91, %v90
    %v106 = vpack.c.b16 %v93, %v92
    %v107 = vpack.c.b16 %v95, %v94
    %v108 = vpack.c.b16 %v97, %v96
    %v109 = vpack.c.b16 %v99, %v98
    %v110 = vpack.c.b16 %v101, %v100
    %v111 = vpack.c.b16 %v103, %v102
    %120 = vmatpush.bf16.msra.mxu0 %v111
    %121 = vmatpush.bf16.msra.mxu0 %v110
    %122 = vmatpush.bf16.msra.mxu0 %v109
    %123 = vmatpush.bf16.msra.mxu0 %v108
    %124 = vmatpush.bf16.msra.mxu0 %v107
    %125 = vmatpush.bf16.msra.mxu0 %v106
    %126 = vmatpush.bf16.msra.mxu0 %v105
    %127 = vmatpush.bf16.msra.mxu0 %v104
    %128 = vmatmul.bf16.gmra.mxu0 %v55
    %v129 = vpop.f32.mrf.mxu0
    %v130 = vadd.f32 0.0, %v129
    %v131 = vpop.f32.mrf.mxu0
    %132 = vdwg.mxu0
    %v133 = vadd.f32 %v54, %v130
    %134 = vst [vmem:[#allocation7] sm:$0xff] %v133
    // Predicated region
    $region26: #{tpu_custom_call.1} parent=1 // pred_check
      %p135 = pneg %p45
    $region27: #{tpu_custom_call.1} parent=1 // pred_check_branch
      %137 = sbr.rel (%p135) target = $region29
    $region28: #{tpu_custom_call.1} parent=1 // pred_region
      %v138 = vld [vmem:[#allocation7] sm:$0xff]
      %v139 = vmax.f32 %v138, 0.0
      %140 = vst [vmem:[#allocation7] sm:$0xff] %v139
    $region29: #{tpu_custom_call.1} parent=1 // pred_fallthru
      _
    // Predicated region
    $region30: #{tpu_custom_call.1} parent=1 // pred_check
      _
    $region31: #{tpu_custom_call.1} parent=1 // pred_check_branch
      %142 = sbr.rel (0) target = $region33
    $region32: #{tpu_custom_call.1} parent=1 // pred_region
      %144 = vsyncadd [#allocation4], 0
      %s146 = sshll.u32 [#allocation7], 4
      %s147 = int_to_ptr.vmem [resolvable:$true] %s146
      %s148 = sshll.u32 %s3, 4
      %s149 = int_to_ptr.hbm [resolvable:$true] %s148
      %151 = dma.vmem_to_hbm [thread:$0]  %s147, 128, %s149, [#allocation4]
    $region33: #{tpu_custom_call.1} parent=1 // pred_fallthru
      _
    // Predicated region
    $region34: #{tpu_custom_call.1} parent=1 // pred_check
      _
    $region35: #{tpu_custom_call.1} parent=1 // pred_check_branch
      %153 = sbr.rel (0) target = $region37
    $region36: #{tpu_custom_call.1} parent=1 // pred_region
      %155 = dma.done [#allocation4], 128
    $region37: #{tpu_custom_call.1} parent=1 // pred_fallthru
      _
    %156 = vsyncpa [#allocation3], 1
    %157 = vsyncpa [#allocation6], 1
    %158 = vsyncpa [#allocation4], 1

</llo_original>
